<compile_context>
chip_gen: v7x
topology: tpu7x:2x2x1
jax: 0.10.0
libtpu: 0.0.40
codegen_flags: <defaults>
</compile_context>

<pallas_src>
import math

import jax
import jax.numpy as jnp
from jax.experimental import pallas as pl
from jax.experimental.pallas import tpu as pltpu


def _round_up(x, m):
    return ((x + m - 1) // m) * m


# ---------------------------------------------------------------------------
# Pallas kernel: one output-channel tile of the reflect-padded KxK conv,
# expressed as an im2col matmul on the MXU.
# ---------------------------------------------------------------------------
def _spatial_matmul_kernel(p_ref, w_ref, b_ref, o_ref):
    """p_ref: (M_pad, Kc_pad) bf16 resident patch matrix (single-buffered)
    w_ref: (Kc_pad, tn)     bf16 streamed weight tile (double-buffered)
    b_ref: (1, tn)          f32 bias tile
    o_ref: (M_pad, tn)      f32 lane-dense output tile
    """
    o_ref[...] = (
        jnp.dot(p_ref[...], w_ref[...], preferred_element_type=jnp.float32)
        + b_ref[...]
    )


# ---------------------------------------------------------------------------
# Module wrapper (parameters + jitted forward)
# ---------------------------------------------------------------------------
class KernelPredictor:
    def __init__(self, in_channels, out_channels, n_groups, style_channels,
                 kernel_size, key):
        self.in_channels = in_channels
        self.out_channels = out_channels
        self.n_groups = n_groups
        self.w_channels = style_channels
        self.kernel_size = kernel_size

        csp = in_channels * out_channels // n_groups
        cpw = out_channels * out_channels // n_groups
        self._csp = csp
        self._cpw = cpw

        k1, k2, k3, k4, k5, k6 = jax.random.split(key, 6)
        # Conv2d weight layout (O, I, kh, kw), like PyTorch.
        self.spatial_w = 0.1 * jax.random.normal(
            k1, (csp, style_channels, kernel_size, kernel_size), jnp.float32)
        self.spatial_b = 0.1 * jax.random.normal(k2, (csp,), jnp.float32)
        self.pointwise_w = 0.1 * jax.random.normal(
            k3, (cpw, style_channels, 1, 1), jnp.float32)
        self.pointwise_b = 0.1 * jax.random.normal(k4, (cpw,), jnp.float32)
        self.bias_w = 0.1 * jax.random.normal(
            k5, (out_channels, style_channels, 1, 1), jnp.float32)
        self.bias_b = 0.1 * jax.random.normal(k6, (out_channels,), jnp.float32)

        # ---- padded, kernel-ready parameter matrices (computed ONCE) -------
        K = kernel_size
        kc = style_channels * K * K
        self._kc = kc
        self._kc_pad = _round_up(kc, 128)
        self._csp_pad = _round_up(csp, 128)          # 128 is all the HW needs
        n128 = self._csp_pad // 128

        # Per-chip VMEM capacity -> weight-tile budget.
        try:
            self._vmem_cap = int(getattr(pltpu.get_tpu_info(),
                                         "vmem_capacity_bytes", 64 << 20))
        except Exception:                            # pragma: no cover
            self._vmem_cap = 64 << 20                # conservative (v7x)

        # tn: largest 128-multiple that (a) divides csp_pad (no extra streamed
        # weight bytes), (b) fits a ~1/3-of-VMEM double-buffered bf16 tile
        # budget, and (c) leaves >= 2 grid steps when possible (v7x megacore).
        budget = max(4 << 20, self._vmem_cap // 3)
        per_block = 2 * self._kc_pad * 128 * 2       # 2 bufs x (kc_pad,128) bf16
        max_blocks = max(1, budget // per_block)
        cap_blocks = n128 if n128 < 2 else max(1, n128 // 2)
        limit = min(max_blocks, cap_blocks)
        tn_blocks = max(d for d in range(1, n128 + 1)
                        if n128 % d == 0 and d <= limit)
        self._tn = 128 * tn_blocks
        self._grid_n = self._csp_pad // self._tn

        # Spatial conv weight as (Cs*K*K, csp_pad), row order (ci, kh, kw)
        # matching the patch-column order built in the forward; bf16 stream.
        w_mat = self.spatial_w.transpose(1, 2, 3, 0).reshape(kc, csp)
        self._w_spatial_mat = jnp.pad(
            w_mat, ((0, self._kc_pad - kc), (0, self._csp_pad - csp))
        ).astype(jnp.bfloat16)
        self._b_spatial_mat = jnp.pad(
            self.spatial_b, (0, self._csp_pad - csp)).reshape(1, self._csp_pad)

        # Pooled branch (plain JAX under jit): fused [pointwise | bias] matrix.
        self._w_pool_cat = jnp.concatenate(
            [self.pointwise_w.reshape(cpw, style_channels).T,
             self.bias_w.reshape(out_channels, style_channels).T], axis=1)
        self._b_pool_cat = jnp.concatenate([self.pointwise_b, self.bias_b])

        self._fwd = self._make_forward()

    # -- jitted forward builder ---------------------------------------------
    def _make_forward(self):
        K = self.kernel_size
        Cs = self.w_channels
        csp, cpw = self._csp, self._cpw
        out_ch = self.out_channels
        in_g = self.in_channels // self.n_groups
        out_g = self.out_channels // self.n_groups
        kc, kc_pad = self._kc, self._kc_pad
        csp_pad, tn, grid_n = self._csp_pad, self._tn, self._grid_n
        vmem_cap = self._vmem_cap
        pad = math.ceil((K - 1) / 2)

        def fwd(w, w_sp, b_sp, w_pool, b_pool):
            B, _, H, W = w.shape
            assert pad < H and pad < W, "reflect padding requires pad < size"

            # ---- channel-last + reflect pad (fused under jit) --------------
            w_cl = jnp.transpose(w, (0, 2, 3, 1))                 # (B,H,W,Cs)
            wp = jnp.pad(w_cl, ((0, 0), (pad, pad), (pad, pad), (0, 0)),
                         mode="reflect")
            OH = H + 2 * pad - K + 1
            OW = W + 2 * pad - K + 1

            # ---- im2col via K*K static shifted slices ----------------------
            # Patch-column order (ci, kh, kw) matches the OIHW weight flatten.
            cols = [wp[:, kh:kh + OH, kw:kw + OW, :]
                    for kh in range(K) for kw in range(K)]
            patches = jnp.stack(cols, axis=-1)                    # (B,OH,OW,Cs,K*K)
            m = B * OH * OW
            m_pad = _round_up(m, 16)                              # bf16 packing
            patches = jnp.pad(
                patches.reshape(m, kc),
                ((0, m_pad - m), (0, kc_pad - kc))).astype(jnp.bfloat16)

            # ---- VMEM plan from the actual buffers for this trace ----------
            vmem_bytes = (
                m_pad * kc_pad * 2          # patches, single-buffered
                + 2 * kc_pad * tn * 2       # streamed bf16 weight, double-buf
                + 2 * m_pad * tn * 4        # f32 output tile, double-buffered
                + 8 * tn * 4                # bias tile
            )
            vmem_limit = int(min(max(2 * vmem_bytes + (4 << 20), 8 << 20),
                                 vmem_cap - (2 << 20)))

            # ---- spatial conv as a lane-dense tiled matmul on the MXU -------
            # NOTE: weight spec left at the default 2-deep pipeline; Buffered(3)
            # is a low-risk sweep candidate if DMA issue latency shows up.
            spatial_out = pl.pallas_call(
                _spatial_matmul_kernel,
                out_shape=jax.ShapeDtypeStruct((m_pad, csp_pad), jnp.float32),
                grid_spec=pltpu.PrefetchScalarGridSpec(
                    num_scalar_prefetch=0,
                    grid=(grid_n,),
                    in_specs=[
                        pl.BlockSpec((m_pad, kc_pad), lambda j: (0, 0),
                                     pipeline_mode=pl.Buffered(1)),
                        pl.BlockSpec((kc_pad, tn), lambda j: (0, j)),
                        pl.BlockSpec((1, tn), lambda j: (0, j),
                                     pipeline_mode=pl.Buffered(1)),
                    ],
                    out_specs=pl.BlockSpec((m_pad, tn), lambda j: (0, j)),
                ),
                compiler_params=pltpu.CompilerParams(
                    dimension_semantics=("parallel",),
                    vmem_limit_bytes=vmem_limit,
                ),
            )(patches, w_sp, b_sp)

            # strip padding, back to NCHW, exact PyTorch reshape
            spatial = spatial_out[:m, :csp]
            w_spatial = spatial.reshape(B, OH, OW, csp).transpose(0, 3, 1, 2)
            w_spatial = w_spatial.reshape(B, out_ch, in_g, K, K)

            # ---- pooled branch: avg-pool + fused [pointwise | bias] 1x1s ---
            # Deliberately plain JAX inside the jitted forward (perf review):
            # launch overhead + HBM round trip of a 2nd pallas_call dominate
            # this (B,Cs)x(Cs,npool) matmul.
            pooled = jnp.mean(w, axis=(2, 3))                     # (B, Cs)
            pool_out = pooled @ w_pool + b_pool                   # (B, npool)
            w_pointwise = pool_out[:, :cpw].reshape(B, out_ch, out_g, 1, 1)
            bias = pool_out[:, cpw:cpw + out_ch]
            return w_spatial, w_pointwise, bias

        return jax.jit(fwd)

    # -- forward -------------------------------------------------------------
    def __call__(self, w):
        assert w.shape[1] == self.w_channels
        return self._fwd(w, self._w_spatial_mat, self._b_spatial_mat,
                         self._w_pool_cat, self._b_pool_cat)


# ---------------------------------------------------------------------------
# Pure-JAX f32 reference (correctness check only)
# ---------------------------------------------------------------------------
def reference_forward(kp: KernelPredictor, w):
    B, Cs, H, W = w.shape
    K = kp.kernel_size
    pad = math.ceil((K - 1) / 2)
    wp = jnp.pad(w, ((0, 0), (0, 0), (pad, pad), (pad, pad)), mode="reflect")
    ws = jax.lax.conv_general_dilated(
        wp, kp.spatial_w, (1, 1), "VALID",
        dimension_numbers=("NCHW", "OIHW", "NCHW"))
    ws = ws + kp.spatial_b[None, :, None, None]
    ws = ws.reshape(B, kp.out_channels, kp.in_channels // kp.n_groups, K, K)

    pooled = jnp.mean(w, axis=(2, 3))                            # (B, Cs)
    cpw = kp.out_channels * kp.out_channels // kp.n_groups
    pw = pooled @ kp.pointwise_w.reshape(cpw, Cs).T + kp.pointwise_b
    pw = pw.reshape(B, kp.out_channels, kp.out_channels // kp.n_groups, 1, 1)
    b = pooled @ kp.bias_w.reshape(kp.out_channels, Cs).T + kp.bias_b
    return ws, pw, b


if __name__ == "__main__":
    # Small shapes consistent with the module: the AdaConv style tensor has
    # spatial extent == kernel_size (required by the reshape in forward()).
    in_channels, out_channels, n_groups = 4, 4, 2
    style_channels, kernel_size = 8, 3
    B = 2

    key = jax.random.PRNGKey(0)
    kparam, kdata = jax.random.split(key)

    kp = KernelPredictor(in_channels, out_channels, n_groups,
                         style_channels, kernel_size, kparam)

    w = jax.random.normal(
        kdata, (B, style_channels, kernel_size, kernel_size), jnp.float32)

    w_spatial, w_pointwise, bias = kp(w)
    jax.block_until_ready((w_spatial, w_pointwise, bias))

    # sanity-check against the pure-JAX f32 reference
    ws_ref, pw_ref, b_ref = reference_forward(kp, w)
    assert w_spatial.shape == (B, out_channels, in_channels // n_groups,
                               kernel_size, kernel_size)
    assert w_pointwise.shape == (B, out_channels, out_channels // n_groups, 1, 1)
    assert bias.shape == (B, out_channels)
    # spatial branch streams bf16 weights/patches -> loosened tolerance
    assert jnp.allclose(w_spatial, ws_ref, atol=5e-2, rtol=5e-2)
    # pooled branch is f32 -> tight tolerance
    assert jnp.allclose(w_pointwise, pw_ref, atol=1e-4, rtol=1e-4)
    assert jnp.allclose(bias, b_ref, atol=1e-4, rtol=1e-4)

    print("KERNEL_OK")
</pallas_src>

<mosaic_0001>
module attributes {stable_mosaic.version = 11 : i64} {
  func.func @_spatial_matmul_kernel(%arg0: i32, %arg1: memref<32x128xbf16, #tpu.memory_space<vmem>>, %arg2: memref<128x128xbf16, #tpu.memory_space<vmem>>, %arg3: memref<1x128xf32, #tpu.memory_space<vmem>>, %arg4: memref<32x128xf32, #tpu.memory_space<vmem>>) attributes {dimension_semantics = [#tpu.dimension_semantics<parallel>], iteration_bounds = array<i64: 1>, scalar_prefetch = 0 : i64, scratch_operands = 0 : i64, tpu.core_type = #tpu.core_type<tc>, window_params = [{pipeline_mode = #tpu.pipeline_mode<synchronous>, transform_indices = @transform_0, window_bounds = array<i64: 32, 128>}, {transform_indices = @transform_1, window_bounds = array<i64: 128, 128>}, {pipeline_mode = #tpu.pipeline_mode<synchronous>, transform_indices = @transform_2, window_bounds = array<i64: 1, 128>}, {transform_indices = @transform_3, window_bounds = array<i64: 32, 128>}]} {
    %c0 = arith.constant 0 : index
    %c0_0 = arith.constant 0 : index
    %0 = vector.load %arg1[%c0, %c0_0] : memref<32x128xbf16, #tpu.memory_space<vmem>>, vector<32x128xbf16>
    %c0_1 = arith.constant 0 : index
    %c0_2 = arith.constant 0 : index
    %1 = vector.load %arg2[%c0_1, %c0_2] : memref<128x128xbf16, #tpu.memory_space<vmem>>, vector<128x128xbf16>
    %cst = arith.constant dense<0.000000e+00> : vector<32x128xf32>
    %2 = tpu.matmul %0, %1, %cst {dimension_numbers = #tpu.dot_dimension_numbers<[1], [0], [0], [1], [0, 0, 1, 1], [], []>} : vector<32x128xbf16>, vector<128x128xbf16>, vector<32x128xf32> -> vector<32x128xf32>
    %c0_3 = arith.constant 0 : index
    %c0_4 = arith.constant 0 : index
    %3 = vector.load %arg3[%c0_3, %c0_4] : memref<1x128xf32, #tpu.memory_space<vmem>>, vector<1x128xf32>
    %4 = vector.broadcast %3 : vector<1x128xf32> to vector<32x128xf32>
    %5 = arith.addf %2, %4 : vector<32x128xf32>
    %c0_5 = arith.constant 0 : index
    %c0_6 = arith.constant 0 : index
    %6 = vector.load %arg4[%c0_5, %c0_6] : memref<32x128xf32, #tpu.memory_space<vmem>>, vector<32x128xf32>
    tpu.vector_store %arg4[%c0_5, %c0_6], %5 {strides = array<i32>} : memref<32x128xf32, #tpu.memory_space<vmem>>, vector<32x128xf32>,
    return
  }
  func.func @transform_0(%arg0: i32) -> (i32, i32) {
    %c0_i32 = arith.constant 0 : i32
    %c0_i32_0 = arith.constant 0 : i32
    %c0_i32_1 = arith.constant 0 : i32
    return %c0_i32, %c0_i32_0 : i32, i32
  }
  func.func @transform_1(%arg0: i32) -> (i32, i32) {
    %c0_i32 = arith.constant 0 : i32
    %c0_i32_0 = arith.constant 0 : i32
    return %c0_i32, %arg0 : i32, i32
  }
  func.func @transform_2(%arg0: i32) -> (i32, i32) {
    %c0_i32 = arith.constant 0 : i32
    %c0_i32_0 = arith.constant 0 : i32
    return %c0_i32, %arg0 : i32, i32
  }
  func.func @transform_3(%arg0: i32) -> (i32, i32) {
    %c0_i32 = arith.constant 0 : i32
    %c0_i32_0 = arith.constant 0 : i32
    return %c0_i32, %arg0 : i32, i32
  }
}

</mosaic_0001>

<llo_original>
// kernel: fwd.1
$region0: #{fwd.1}
  #allocation0 [shape = 'u32[]', space=smem, size = 0x4, offset = 0x4, fixed_abs, tag = 'smem constant byte address 0x4 - core index']
  #allocation1 [shape = 'u32[144,128]{1,0:T(1,128)}', space=vmem, size = 0x12000, scoped, tag = 'internal scratch']
  %s0 = inlined_call_operand.vmem [shape: bf16[32,128], index: 0, kind: input, shape index: {}]
  %s1 = inlined_call_operand.vmem [shape: bf16[128,128], index: 1, kind: input, shape index: {}]
  %s2 = inlined_call_operand.vmem [shape: f32[1,128], index: 2, kind: input, shape index: {}]
  %s3 = inlined_call_operand.vmem [shape: f32[32,128], index: 3, kind: output, shape index: {}]
  %s4 = sld [smem:[#allocation0]]
  $region22: #{fwd.1} parent=0
    _
  %s6 = ssub.s32 1, %s4
  %s7 = scalar_select 0, %s6, %s4
  // Predicated region
  $region2: #{fwd.1} parent=0 // pred_check
    _
  $region3: #{fwd.1} parent=0 // pred_check_branch
    %9 = sbr.rel (0) target = $region5
  $region4: #{fwd.1} parent=0 // pred_region
    _
  $region5: #{fwd.1} parent=0 // pred_fallthru
    _
  // Predicated region
  $region6: #{fwd.1} parent=0 // pred_check
    _
  $region7: #{fwd.1} parent=0 // pred_check_branch
    %11 = sbr.rel (0) target = $region9
  $region8: #{fwd.1} parent=0 // pred_region
    _
  $region9: #{fwd.1} parent=0 // pred_fallthru
    _
  // Predicated region
  $region10: #{fwd.1} parent=0 // pred_check
    _
  $region11: #{fwd.1} parent=0 // pred_check_branch
    %13 = sbr.rel (0) target = $region13
  $region12: #{fwd.1} parent=0 // pred_region
    _
  $region13: #{fwd.1} parent=0 // pred_fallthru
    _
  %v15 = vld [vmem:[%s0] sm:$0xf]
  %v16 = vld [vmem:[%s0 + $0x4] sm:$0xf]
  %v17 = vld [vmem:[%s0 + $0x8] sm:$0xf]
  %v18 = vld [vmem:[%s0 + $0xc] sm:$0xf]
  %v19 = vld [vmem:[%s1] sm:$0xf]
  %v20 = vld [vmem:[%s1 + $0x4] sm:$0xf]
  %v21 = vld [vmem:[%s1 + $0x8] sm:$0xf]
  %v22 = vld [vmem:[%s1 + $0xc] sm:$0xf]
  %v23 = vld [vmem:[%s1 + $0x10] sm:$0xf]
  %v24 = vld [vmem:[%s1 + $0x14] sm:$0xf]
  %v25 = vld [vmem:[%s1 + $0x18] sm:$0xf]
  %v26 = vld [vmem:[%s1 + $0x1c] sm:$0xf]
  %v27 = vld [vmem:[%s1 + $0x20] sm:$0xf]
  %v28 = vld [vmem:[%s1 + $0x24] sm:$0xf]
  %v29 = vld [vmem:[%s1 + $0x28] sm:$0xf]
  %v30 = vld [vmem:[%s1 + $0x2c] sm:$0xf]
  %v31 = vld [vmem:[%s1 + $0x30] sm:$0xf]
  %v32 = vld [vmem:[%s1 + $0x34] sm:$0xf]
  %v33 = vld [vmem:[%s1 + $0x38] sm:$0xf]
  %v34 = vld [vmem:[%s1 + $0x3c] sm:$0xf]
  %v35 = vld [vmem:[%s2] sm:$0x1]
  %v37 = vlaneseq
  %v38 = vshrl.u32 %v37, 7
  %v39 = vsub.s32 0, %v38
  %v40 = vrot.slane %v35, %v39
  %v46 = vunpack.c.l.b16 %v15
  %v47 = vunpack.c.l.b16 %v16
  %v48 = vunpack.c.l.b16 %v17
  %v49 = vunpack.c.l.b16 %v18
  %v50 = vpack.c.b16 %v47, %v46
  %v51 = vpack.c.b16 %v49, %v48
  %v70 = vunpack.c.l.b16 %v19
  %v71 = vunpack.c.l.b16 %v20
  %v72 = vunpack.c.l.b16 %v21
  %v73 = vunpack.c.l.b16 %v22
  %v74 = vunpack.c.l.b16 %v23
  %v75 = vunpack.c.l.b16 %v24
  %v76 = vunpack.c.l.b16 %v25
  %v77 = vunpack.c.l.b16 %v26
  %v78 = vunpack.c.l.b16 %v27
  %v79 = vunpack.c.l.b16 %v28
  %v80 = vunpack.c.l.b16 %v29
  %v81 = vunpack.c.l.b16 %v30
  %v82 = vunpack.c.l.b16 %v31
  %v83 = vunpack.c.l.b16 %v32
  %v84 = vunpack.c.l.b16 %v33
  %v85 = vunpack.c.l.b16 %v34
  %v86 = vpack.c.b16 %v71, %v70
  %v87 = vpack.c.b16 %v73, %v72
  %v88 = vpack.c.b16 %v75, %v74
  %v89 = vpack.c.b16 %v77, %v76
  %v90 = vpack.c.b16 %v79, %v78
  %v91 = vpack.c.b16 %v81, %v80
  %v92 = vpack.c.b16 %v83, %v82
  %v93 = vpack.c.b16 %v85, %v84
  %102 = vmatprep.subr.bf16.mxu0 0
  %103 = vmatpush1.bf16.msra.mxu0 %v86
  %104 = vmatprep.subr.bf16.mxu0 0
  %105 = vmatpush1.bf16.msra.mxu0 %v87
  %106 = vmatprep.subr.bf16.mxu0 0
  %107 = vmatpush1.bf16.msra.mxu0 %v88
  %108 = vmatprep.subr.bf16.mxu0 0
  %109 = vmatpush1.bf16.msra.mxu0 %v89
  %110 = vmatprep.subr.bf16.mxu0 0
  %111 = vmatpush1.bf16.msra.mxu0 %v90
  %112 = vmatprep.subr.bf16.mxu0 0
  %113 = vmatpush1.bf16.msra.mxu0 %v91
  %114 = vmatprep.subr.bf16.mxu0 0
  %115 = vmatpush1.bf16.msra.mxu0 %v92
  %116 = vmatprep.subr.bf16.mxu0 0
  %117 = vmatpush1.bf16.msra.mxu0 %v93
  %118 = vmatprep.subr.bf16.mxu0 0
  %119 = vmatpush1.bf16.msra.mxu0 0
  %120 = vmatprep.subr.bf16.mxu0 0
  %121 = vmatpush1.bf16.msra.mxu0 0
  %122 = vmatprep.subr.bf16.mxu0 0
  %123 = vmatpush1.bf16.msra.mxu0 0
  %124 = vmatprep.subr.bf16.mxu0 0
  %125 = vmatpush1.bf16.msra.mxu0 0
  %126 = vmatprep.subr.bf16.mxu0 0
  %127 = vmatpush1.bf16.msra.mxu0 0
  %128 = vmatprep.subr.bf16.mxu0 0
  %129 = vmatpush1.bf16.msra.mxu0 0
  %130 = vmatprep.subr.bf16.mxu0 0
  %131 = vmatpush1.bf16.msra.mxu0 0
  %132 = vmatprep.subr.bf16.mxu0 0
  %133 = vmatpush1.bf16.msra.mxu0 0
  %134 = vmatprep.mubr.bf16.mxu0 0
  %135 = vmatmul.mubr.bf16.gmra.mrb[0].mxu0 %v50
  %v136 = vpop.f32.mrb[0].mxu0
  %v137 = vadd.f32 %v40, %v136
  %v138 = vpop.f32.mrb[0].mxu0
  %v139 = vpop.f32.mrb[0].mxu0
  %v140 = vadd.f32 %v40, %v139
  %v141 = vpop.f32.mrb[0].mxu0
  %142 = vmatprep.mubr.bf16.mxu0 0
  %143 = vmatmul.mubr.bf16.gmra.mrb[0].mxu0 %v51
  %v144 = vpop.f32.mrb[0].mxu0
  %v145 = vadd.f32 %v40, %v144
  %v146 = vpop.f32.mrb[0].mxu0
  %v147 = vpop.f32.mrb[0].mxu0
  %v148 = vadd.f32 %v40, %v147
  %v149 = vpop.f32.mrb[0].mxu0
  %150 = vdwg.mxu0
  %151 = vst [vmem:[%s3] sm:$0xff] %v137
  %152 = vst [vmem:[%s3 + $0x8] sm:$0xff] %v140
  %153 = vst [vmem:[%s3 + $0x10] sm:$0xff] %v145
  %154 = vst [vmem:[%s3 + $0x18] sm:$0xff] %v148
  // Predicated region
  $region14: #{fwd.1} parent=0 // pred_check
    _
  $region15: #{fwd.1} parent=0 // pred_check_branch
    %156 = sbr.rel (0) target = $region17
  $region16: #{fwd.1} parent=0 // pred_region
    _
  $region17: #{fwd.1} parent=0 // pred_fallthru
    _
  // Predicated region
  $region18: #{fwd.1} parent=0 // pred_check
    _
  $region19: #{fwd.1} parent=0 // pred_check_branch
    %158 = sbr.rel (0) target = $region21
  $region20: #{fwd.1} parent=0 // pred_region
    _
  $region21: #{fwd.1} parent=0 // pred_fallthru
    _

</llo_original>
